<compile_context>
chip_gen: v6e
topology: v6e:2x2x1
jax: 0.10.0
libtpu: 0.0.40
codegen_flags: <defaults>
</compile_context>

<pallas_src>
import jax
import jax.numpy as jnp
from jax.experimental import pallas as pl
from jax.experimental.pallas import tpu as pltpu

# Model dims (small, synthetic)
D_IN, H1, LATENT, H2, D_OUT = 32, 64, 16, 32, 8
B = 16           # batch (multiple of 8 sublanes)
LANES = 128      # lane-dense padded feature width

# Row offsets of each piece inside the packed parameter blob (all multiples of 8).
R_W1 = 0                    # (D_IN, 128)  : w1, cols 0:H1 valid
R_W2 = R_W1 + D_IN          # (128, 128)   : w2, rows 0:H1 / cols 0:LATENT valid
R_W3 = R_W2 + LANES         # (128, 128)   : w3, rows 0:LATENT / cols 0:H2 valid
R_W4 = R_W3 + LANES         # (128, 128)   : w4, rows 0:H2 / cols 0:D_OUT valid
R_B = R_W4 + LANES          # (8, 128)     : rows 0..3 = b1, b2, b3, b4
R_TOTAL = R_B + 8           # 424 rows total


def encoder_mlp_kernel(x_ref, p_ref, out_ref):
    x = x_ref[...]                                  # (B, D_IN) f32

    biases = p_ref[R_B:R_B + 8, :]                  # (8, 128)
    b1 = biases[0:1, :]
    b2 = biases[1:2, :]
    b3 = biases[2:3, :]
    b4 = biases[3:4, :]

    # --- encoder ---
    h = jnp.dot(x, p_ref[R_W1:R_W1 + D_IN, :],
                preferred_element_type=jnp.float32) + b1
    h = jnp.maximum(h, 0.0)                         # (B, 128), cols H1: are 0
    z = jnp.dot(h, p_ref[R_W2:R_W2 + LANES, :],
                preferred_element_type=jnp.float32) + b2
    # encoder returns (z, h); h is discarded, matching `x, _ = self.encoder(x)`

    # --- mlp head ---
    m = jnp.dot(z, p_ref[R_W3:R_W3 + LANES, :],
                preferred_element_type=jnp.float32) + b3
    m = jnp.maximum(m, 0.0)
    y = jnp.dot(m, p_ref[R_W4:R_W4 + LANES, :],
                preferred_element_type=jnp.float32) + b4

    out_ref[...] = y                                # (B, 128) lane-dense store


def pack_params(params):
    """Pack the four (W, b) pairs into one lane-dense (R_TOTAL, 128) f32 blob."""
    (w1, b1, w2, b2, w3, b3, w4, b4) = params

    def pad_block(a, rows):
        blk = jnp.zeros((rows, LANES), jnp.float32)
        return blk.at[: a.shape[0], : a.shape[1]].set(a)

    bias_blk = jnp.zeros((8, LANES), jnp.float32)
    bias_blk = bias_blk.at[0, :H1].set(b1.reshape(-1))
    bias_blk = bias_blk.at[1, :LATENT].set(b2.reshape(-1))
    bias_blk = bias_blk.at[2, :H2].set(b3.reshape(-1))
    bias_blk = bias_blk.at[3, :D_OUT].set(b4.reshape(-1))

    packed = jnp.concatenate(
        [pad_block(w1, D_IN),      # rows   0:32
         pad_block(w2, LANES),     # rows  32:160 (zero rows H1:128 keep math exact)
         pad_block(w3, LANES),     # rows 160:288
         pad_block(w4, LANES),     # rows 288:416
         bias_blk],                # rows 416:424
        axis=0)
    assert packed.shape == (R_TOTAL, LANES)
    return packed


def encoder_mlp(x, packed_params):
    out = pl.pallas_call(
        encoder_mlp_kernel,
        out_shape=jax.ShapeDtypeStruct((B, LANES), jnp.float32),
        in_specs=[pl.BlockSpec(memory_space=pltpu.MemorySpace.VMEM),
                  pl.BlockSpec(memory_space=pltpu.MemorySpace.VMEM)],
        out_specs=pl.BlockSpec(memory_space=pltpu.MemorySpace.VMEM),
    )(x, packed_params)
    return out[:, :D_OUT]


def init_params(key):
    ks = jax.random.split(key, 4)

    def linear(kw, fan_in, fan_out):
        scale = 1.0 / jnp.sqrt(jnp.float32(fan_in))
        w = jax.random.uniform(kw, (fan_in, fan_out), jnp.float32, -scale, scale)
        b = jax.random.uniform(jax.random.fold_in(kw, 1), (1, fan_out),
                               jnp.float32, -scale, scale)
        return w, b

    w1, b1 = linear(ks[0], D_IN, H1)
    w2, b2 = linear(ks[1], H1, LATENT)
    w3, b3 = linear(ks[2], LATENT, H2)
    w4, b4 = linear(ks[3], H2, D_OUT)
    return (w1, b1, w2, b2, w3, b3, w4, b4)


def reference(x, params):
    (w1, b1, w2, b2, w3, b3, w4, b4) = params
    h = jnp.maximum(x @ w1 + b1, 0.0)
    z = h @ w2 + b2                     # encoder -> (latent, hidden); keep latent
    m = jnp.maximum(z @ w3 + b3, 0.0)
    return m @ w4 + b4


if __name__ == "__main__":
    key = jax.random.PRNGKey(0)
    kx, kp = jax.random.split(key)
    x = jax.random.normal(kx, (B, D_IN), jnp.float32)
    params = init_params(kp)
    packed = pack_params(params)

    out = encoder_mlp(x, packed)
    out = jax.block_until_ready(out)

    ref = reference(x, params)
    assert out.shape == (B, D_OUT)
    assert jnp.allclose(out, ref, atol=1e-5, rtol=1e-5), "mismatch vs reference"
    print("KERNEL_OK")
</pallas_src>

<mosaic_0001>
module attributes {stable_mosaic.version = 11 : i64} {
  func.func @encoder_mlp_kernel(%arg0: memref<16x32xf32, #tpu.memory_space<vmem>>, %arg1: memref<424x128xf32, #tpu.memory_space<vmem>>, %arg2: memref<16x128xf32, #tpu.memory_space<vmem>>) attributes {dimension_semantics = [], scalar_prefetch = 0 : i64, scratch_operands = 0 : i64, tpu.core_type = #tpu.core_type<tc>} {
    %c0 = arith.constant 0 : index
    %c0_0 = arith.constant 0 : index
    %0 = vector.load %arg0[%c0, %c0_0] : memref<16x32xf32, #tpu.memory_space<vmem>>, vector<16x32xf32>
    %c416 = arith.constant 416 : index
    %c0_1 = arith.constant 0 : index
    %1 = vector.load %arg1[%c416, %c0_1] : memref<424x128xf32, #tpu.memory_space<vmem>>, vector<8x128xf32>
    %2 = vector.extract_strided_slice %1 {offsets = [0, 0], sizes = [1, 128], strides = [1, 1]} : vector<8x128xf32> to vector<1x128xf32>
    %3 = vector.extract_strided_slice %1 {offsets = [1, 0], sizes = [1, 128], strides = [1, 1]} : vector<8x128xf32> to vector<1x128xf32>
    %4 = vector.extract_strided_slice %1 {offsets = [2, 0], sizes = [1, 128], strides = [1, 1]} : vector<8x128xf32> to vector<1x128xf32>
    %5 = vector.extract_strided_slice %1 {offsets = [3, 0], sizes = [1, 128], strides = [1, 1]} : vector<8x128xf32> to vector<1x128xf32>
    %c0_2 = arith.constant 0 : index
    %c0_3 = arith.constant 0 : index
    %6 = vector.load %arg1[%c0_2, %c0_3] : memref<424x128xf32, #tpu.memory_space<vmem>>, vector<32x128xf32>
    %cst = arith.constant dense<0.000000e+00> : vector<16x128xf32>
    %7 = tpu.matmul %0, %6, %cst {dimension_numbers = #tpu.dot_dimension_numbers<[1], [0], [0], [1], [0, 0, 1, 1], [], []>} : vector<16x32xf32>, vector<32x128xf32>, vector<16x128xf32> -> vector<16x128xf32>
    %8 = vector.broadcast %2 : vector<1x128xf32> to vector<16x128xf32>
    %9 = arith.addf %7, %8 : vector<16x128xf32>
    %cst_4 = arith.constant 0.000000e+00 : f32
    %10 = vector.broadcast %cst_4 : f32 to vector<16x128xf32>
    %11 = arith.maximumf %9, %10 : vector<16x128xf32>
    %c32 = arith.constant 32 : index
    %c0_5 = arith.constant 0 : index
    %12 = vector.load %arg1[%c32, %c0_5] : memref<424x128xf32, #tpu.memory_space<vmem>>, vector<128x128xf32>
    %cst_6 = arith.constant dense<0.000000e+00> : vector<16x128xf32>
    %13 = tpu.matmul %11, %12, %cst_6 {dimension_numbers = #tpu.dot_dimension_numbers<[1], [0], [0], [1], [0, 0, 1, 1], [], []>} : vector<16x128xf32>, vector<128x128xf32>, vector<16x128xf32> -> vector<16x128xf32>
    %14 = vector.broadcast %3 : vector<1x128xf32> to vector<16x128xf32>
    %15 = arith.addf %13, %14 : vector<16x128xf32>
    %c160 = arith.constant 160 : index
    %c0_7 = arith.constant 0 : index
    %16 = vector.load %arg1[%c160, %c0_7] : memref<424x128xf32, #tpu.memory_space<vmem>>, vector<128x128xf32>
    %cst_8 = arith.constant dense<0.000000e+00> : vector<16x128xf32>
    %17 = tpu.matmul %15, %16, %cst_8 {dimension_numbers = #tpu.dot_dimension_numbers<[1], [0], [0], [1], [0, 0, 1, 1], [], []>} : vector<16x128xf32>, vector<128x128xf32>, vector<16x128xf32> -> vector<16x128xf32>
    %18 = vector.broadcast %4 : vector<1x128xf32> to vector<16x128xf32>
    %19 = arith.addf %17, %18 : vector<16x128xf32>
    %cst_9 = arith.constant 0.000000e+00 : f32
    %20 = vector.broadcast %cst_9 : f32 to vector<16x128xf32>
    %21 = arith.maximumf %19, %20 : vector<16x128xf32>
    %c288 = arith.constant 288 : index
    %c0_10 = arith.constant 0 : index
    %22 = vector.load %arg1[%c288, %c0_10] : memref<424x128xf32, #tpu.memory_space<vmem>>, vector<128x128xf32>
    %cst_11 = arith.constant dense<0.000000e+00> : vector<16x128xf32>
    %23 = tpu.matmul %21, %22, %cst_11 {dimension_numbers = #tpu.dot_dimension_numbers<[1], [0], [0], [1], [0, 0, 1, 1], [], []>} : vector<16x128xf32>, vector<128x128xf32>, vector<16x128xf32> -> vector<16x128xf32>
    %24 = vector.broadcast %5 : vector<1x128xf32> to vector<16x128xf32>
    %25 = arith.addf %23, %24 : vector<16x128xf32>
    %c0_12 = arith.constant 0 : index
    %c0_13 = arith.constant 0 : index
    %26 = vector.load %arg2[%c0_12, %c0_13] : memref<16x128xf32, #tpu.memory_space<vmem>>, vector<16x128xf32>
    tpu.vector_store %arg2[%c0_12, %c0_13], %25 {strides = array<i32>} : memref<16x128xf32, #tpu.memory_space<vmem>>, vector<16x128xf32>,
    return
  }
}

</mosaic_0001>

<llo_original>
// kernel: tpu_custom_call.1
$region0: #{tpu_custom_call.1}
  #allocation0 [shape = 'u32[]', space=smem, size = 0x4, offset = 0x4, fixed_abs, tag = 'smem constant byte address 0x4 - core index']
  #allocation1 [shape = 'u32[144,128]{1,0:T(1,128)}', space=vmem, size = 0x12000, scoped, tag = 'internal scratch']
  %s0 = inlined_call_operand.hbm [shape: f32[16,32], index: 0, kind: input, shape index: {}]
  %s1 = inlined_call_operand.hbm [shape: f32[424,128], index: 1, kind: input, shape index: {}]
  %s2 = inlined_call_operand.hbm [shape: f32[16,128], index: 2, kind: output, shape index: {}]
  %s3 = sld [smem:[#allocation0]]
  $region26: #{tpu_custom_call.1} parent=0
    _
  %s5 = ssub.s32 1, %s3
  %s6 = scalar_select 0, %s5, %s3
  $region1: #{tpu_custom_call.1} parent=0
    #allocation2 [shape = 'u8[8192]{0}', space=vmem, size = 0x2000, scoped, tag = 'input window, operand 0, single buffered']
    #allocation3 [shape = 's32[1]{0}', space=sflag, size = 0x4, scoped, tag = 'scoped memory for tpu_custom_call.1']
    #allocation4 [shape = 's32[1]{0}', space=sflag, size = 0x4, scoped, tag = 'scoped memory for tpu_custom_call.1']
    #allocation5 [shape = 'u8[217088]{0}', space=vmem, size = 0x35000, scoped, tag = 'input window, operand 1, single buffered']
    #allocation6 [shape = 's32[1]{0}', space=sflag, size = 0x4, scoped, tag = 'scoped memory for tpu_custom_call.1']
    #allocation7 [shape = 'u8[8192]{0}', space=vmem, size = 0x2000, scoped, tag = 'output window, operand 0, single buffered']
    %7 = vsyncpa [#allocation3], 0
    %8 = vsyncpa [#allocation6], 0
    %9 = vsyncpa [#allocation4], 0
    // Predicated region
    $region2: #{tpu_custom_call.1} parent=1 // pred_check
      _
    $region3: #{tpu_custom_call.1} parent=1 // pred_check_branch
      %11 = sbr.rel (0) target = $region5
    $region4: #{tpu_custom_call.1} parent=1 // pred_region
      %s13 = ssub.s32 256, 256
      %14 = vsyncadd [#allocation3], %s13
      %s15 = sshll.u32 [#allocation2], 4
      %s16 = int_to_ptr.vmem [resolvable:$true] %s15
      %21 = dma.hbm_to_vmem [thread:$0]  %s0, 256, %s16, [#allocation3], 128, 128, 8
    $region5: #{tpu_custom_call.1} parent=1 // pred_fallthru
      _
    // Predicated region
    $region6: #{tpu_custom_call.1} parent=1 // pred_check
      _
    $region7: #{tpu_custom_call.1} parent=1 // pred_check_branch
      %23 = sbr.rel (0) target = $region9
    $region8: #{tpu_custom_call.1} parent=1 // pred_region
      %s25 = ssub.s32 6784, 6784
      %26 = vsyncadd [#allocation6], %s25
      %s27 = sshll.u32 [#allocation5], 4
      %s28 = int_to_ptr.vmem [resolvable:$true] %s27
      %33 = dma.hbm_to_vmem [thread:$0]  %s1, 6784, %s28, [#allocation6], 128, 128, 8
    $region9: #{tpu_custom_call.1} parent=1 // pred_fallthru
      _
    // Predicated region
    $region10: #{tpu_custom_call.1} parent=1 // pred_check
      _
    $region11: #{tpu_custom_call.1} parent=1 // pred_check_branch
      %35 = sbr.rel (0) target = $region13
    $region12: #{tpu_custom_call.1} parent=1 // pred_region
      %36 = dma.done [#allocation3], 256
    $region13: #{tpu_custom_call.1} parent=1 // pred_fallthru
      _
    // Predicated region
    $region14: #{tpu_custom_call.1} parent=1 // pred_check
      _
    $region15: #{tpu_custom_call.1} parent=1 // pred_check_branch
      %38 = sbr.rel (0) target = $region17
    $region16: #{tpu_custom_call.1} parent=1 // pred_region
      %39 = dma.done [#allocation6], 6784
    $region17: #{tpu_custom_call.1} parent=1 // pred_fallthru
      _
    %v40 = vld [vmem:[#allocation2] sm:$0xff]
    %v41 = vld [vmem:[#allocation2 + $0x8] sm:$0xff]
    %v42 = vld [vmem:[#allocation5 + $0x1a0] sm:$0xff]
    %v43 = vld [vmem:[#allocation5] sm:$0xff]
    %v44 = vld [vmem:[#allocation5 + $0x8] sm:$0xff]
    %v45 = vld [vmem:[#allocation5 + $0x10] sm:$0xff]
    %v46 = vld [vmem:[#allocation5 + $0x18] sm:$0xff]
    %v47 = vlaneseq
    %v48 = vshrl.u32 %v47, 7
    %v49 = vsub.s32 0, %v48
    %v50 = vrot.slane %v42, %v49
    %vm51 = vcmask 261120
    %v53 = vsel %vm51, %v40, 0
    %v56 = vsel %vm51, %v41, 0
    %58 = vmatprep.subr.mxu0 0.0
    %59 = vmatpush1.msra.mxu0 0.0
    %60 = vmatprep.subr.mxu0 0.0
    %61 = vmatpush1.msra.mxu0 0.0
    %62 = vmatprep.subr.mxu0 0.0
    %63 = vmatpush1.msra.mxu0 0.0
    %64 = vmatprep.subr.mxu0 0.0
    %65 = vmatpush1.msra.mxu0 0.0
    %66 = vmatprep.subr.mxu0 0.0
    %67 = vmatpush1.msra.mxu0 0.0
    %68 = vmatprep.subr.mxu0 0.0
    %69 = vmatpush1.msra.mxu0 0.0
    %70 = vmatprep.subr.mxu0 0.0
    %71 = vmatpush1.msra.mxu0 0.0
    %72 = vmatprep.subr.mxu0 0.0
    %73 = vmatpush1.msra.mxu0 0.0
    %74 = vmatprep.subr.mxu0 0.0
    %75 = vmatpush1.msra.mxu0 0.0
    %76 = vmatprep.subr.mxu0 0.0
    %77 = vmatpush1.msra.mxu0 0.0
    %78 = vmatprep.subr.mxu0 0.0
    %79 = vmatpush1.msra.mxu0 0.0
    %80 = vmatprep.subr.mxu0 0.0
    %81 = vmatpush1.msra.mxu0 0.0
    %82 = vmatprep.subr.mxu0 0.0
    %83 = vmatpush1.msra.mxu0 %v46
    %84 = vmatprep.subr.mxu0 0.0
    %85 = vmatpush1.msra.mxu0 %v45
    %86 = vmatprep.subr.mxu0 0.0
    %87 = vmatpush1.msra.mxu0 %v44
    %88 = vmatprep.subr.mxu0 0.0
    %89 = vmatpush1.msra.mxu0 %v43
    %90 = vmatprep.subr.mxu0 0.0
    %91 = vmatpush2.msra.mxu0 0.0
    %92 = vmatprep.subr.mxu0 0.0
    %93 = vmatpush2.msra.mxu0 0.0
    %94 = vmatprep.subr.mxu0 0.0
    %95 = vmatpush2.msra.mxu0 0.0
    %96 = vmatprep.subr.mxu0 0.0
    %97 = vmatpush2.msra.mxu0 0.0
    %98 = vmatprep.subr.mxu0 0.0
    %99 = vmatpush2.msra.mxu0 0.0
    %100 = vmatprep.subr.mxu0 0.0
    %101 = vmatpush2.msra.mxu0 0.0
    %102 = vmatprep.subr.mxu0 0.0
    %103 = vmatpush2.msra.mxu0 0.0
    %104 = vmatprep.subr.mxu0 0.0
    %105 = vmatpush2.msra.mxu0 0.0
    %106 = vmatprep.subr.mxu0 0.0
    %107 = vmatpush2.msra.mxu0 0.0
    %108 = vmatprep.subr.mxu0 0.0
    %109 = vmatpush2.msra.mxu0 0.0
    %110 = vmatprep.subr.mxu0 0.0
    %111 = vmatpush2.msra.mxu0 0.0
    %112 = vmatprep.subr.mxu0 0.0
    %113 = vmatpush2.msra.mxu0 0.0
    %114 = vmatprep.subr.mxu0 0.0
    %115 = vmatpush2.msra.mxu0 0.0
    %116 = vmatprep.subr.mxu0 0.0
    %117 = vmatpush2.msra.mxu0 0.0
    %118 = vmatprep.subr.mxu0 0.0
    %119 = vmatpush2.msra.mxu0 0.0
    %120 = vmatprep.subr.mxu0 0.0
    %121 = vmatpush2.msra.mxu0 0.0
    %122 = vmatprep.mubr.f32.mxu0 0.0
    %123 = vmatmul.mubr.f32.gmra.mxu0 %v53
    %v124 = vpop.f32.mrf.mxu0
    %v125 = vadd.f32 %v50, %v124
    %v126 = vpop.f32.mrf.mxu0
    %127 = vmatprep.mubr.f32.mxu0 0.0
    %128 = vmatmul.mubr.f32.gmra.mxu0 %v56
    %v129 = vpop.f32.mrf.mxu0
    %v130 = vadd.f32 %v50, %v129
    %v131 = vpop.f32.mrf.mxu0
    %132 = vdwg.mxu0
    %v133 = vmax.f32 %v125, 0.0
    %v134 = vmax.f32 %v130, 0.0
    %v135 = vld [vmem:[#allocation5 + $0x20] sm:$0xff]
    %v136 = vld [vmem:[#allocation5 + $0x28] sm:$0xff]
    %v137 = vld [vmem:[#allocation5 + $0x30] sm:$0xff]
    %v138 = vld [vmem:[#allocation5 + $0x38] sm:$0xff]
    %v139 = vld [vmem:[#allocation5 + $0x40] sm:$0xff]
    %v140 = vld [vmem:[#allocation5 + $0x48] sm:$0xff]
    %v141 = vld [vmem:[#allocation5 + $0x50] sm:$0xff]
    %v142 = vld [vmem:[#allocation5 + $0x58] sm:$0xff]
    %v143 = vld [vmem:[#allocation5 + $0x60] sm:$0xff]
    %v144 = vld [vmem:[#allocation5 + $0x68] sm:$0xff]
    %v145 = vld [vmem:[#allocation5 + $0x70] sm:$0xff]
    %v146 = vld [vmem:[#allocation5 + $0x78] sm:$0xff]
    %v147 = vld [vmem:[#allocation5 + $0x80] sm:$0xff]
    %v148 = vld [vmem:[#allocation5 + $0x88] sm:$0xff]
    %v149 = vld [vmem:[#allocation5 + $0x90] sm:$0xff]
    %v150 = vld [vmem:[#allocation5 + $0x98] sm:$0xff]
    %v151 = vlaneseq
    %v152 = vshrl.u32 %v151, 7
    %v153 = vsub.s32 1, %v152
    %v154 = vrot.slane %v42, %v153
    %155 = vmatprep.subr.mxu0 0.0
    %156 = vmatpush1.msra.mxu0 %v150
    %157 = vmatprep.subr.mxu0 0.0
    %158 = vmatpush1.msra.mxu0 %v149
    %159 = vmatprep.subr.mxu0 0.0
    %160 = vmatpush1.msra.mxu0 %v148
    %161 = vmatprep.subr.mxu0 0.0
    %162 = vmatpush1.msra.mxu0 %v147
    %163 = vmatprep.subr.mxu0 0.0
    %164 = vmatpush1.msra.mxu0 %v146
    %165 = vmatprep.subr.mxu0 0.0
    %166 = vmatpush1.msra.mxu0 %v145
    %167 = vmatprep.subr.mxu0 0.0
    %168 = vmatpush1.msra.mxu0 %v144
    %169 = vmatprep.subr.mxu0 0.0
    %170 = vmatpush1.msra.mxu0 %v143
    %171 = vmatprep.subr.mxu0 0.0
    %172 = vmatpush1.msra.mxu0 %v142
    %173 = vmatprep.subr.mxu0 0.0
    %174 = vmatpush1.msra.mxu0 %v141
    %175 = vmatprep.subr.mxu0 0.0
    %176 = vmatpush1.msra.mxu0 %v140
    %177 = vmatprep.subr.mxu0 0.0
    %178 = vmatpush1.msra.mxu0 %v139
    %179 = vmatprep.subr.mxu0 0.0
    %180 = vmatpush1.msra.mxu0 %v138
    %181 = vmatprep.subr.mxu0 0.0
    %182 = vmatpush1.msra.mxu0 %v137
    %183 = vmatprep.subr.mxu0 0.0
    %184 = vmatpush1.msra.mxu0 %v136
    %185 = vmatprep.subr.mxu0 0.0
    %186 = vmatpush1.msra.mxu0 %v135
    %187 = vmatprep.subr.mxu0 0.0
    %188 = vmatpush2.msra.mxu0 0.0
    %189 = vmatprep.subr.mxu0 0.0
    %190 = vmatpush2.msra.mxu0 0.0
    %191 = vmatprep.subr.mxu0 0.0
    %192 = vmatpush2.msra.mxu0 0.0
    %193 = vmatprep.subr.mxu0 0.0
    %194 = vmatpush2.msra.mxu0 0.0
    %195 = vmatprep.subr.mxu0 0.0
    %196 = vmatpush2.msra.mxu0 0.0
    %197 = vmatprep.subr.mxu0 0.0
    %198 = vmatpush2.msra.mxu0 0.0
    %199 = vmatprep.subr.mxu0 0.0
    %200 = vmatpush2.msra.mxu0 0.0
    %201 = vmatprep.subr.mxu0 0.0
    %202 = vmatpush2.msra.mxu0 0.0
    %203 = vmatprep.subr.mxu0 0.0
    %204 = vmatpush2.msra.mxu0 0.0
    %205 = vmatprep.subr.mxu0 0.0
    %206 = vmatpush2.msra.mxu0 0.0
    %207 = vmatprep.subr.mxu0 0.0
    %208 = vmatpush2.msra.mxu0 0.0
    %209 = vmatprep.subr.mxu0 0.0
    %210 = vmatpush2.msra.mxu0 0.0
    %211 = vmatprep.subr.mxu0 0.0
    %212 = vmatpush2.msra.mxu0 0.0
    %213 = vmatprep.subr.mxu0 0.0
    %214 = vmatpush2.msra.mxu0 0.0
    %215 = vmatprep.subr.mxu0 0.0
    %216 = vmatpush2.msra.mxu0 0.0
    %217 = vmatprep.subr.mxu0 0.0
    %218 = vmatpush2.msra.mxu0 0.0
    %219 = vmatprep.mubr.f32.mxu0 0.0
    %220 = vmatmul.mubr.f32.gmra.mxu0 %v133
    %v221 = vpop.f32.mrf.mxu0
    %v222 = vadd.f32 %v154, %v221
    %v223 = vpop.f32.mrf.mxu0
    %224 = vmatprep.mubr.f32.mxu0 0.0
    %225 = vmatmul.mubr.f32.gmra.mxu0 %v134
    %v226 = vpop.f32.mrf.mxu0
    %v227 = vadd.f32 %v154, %v226
    %v228 = vpop.f32.mrf.mxu0
    %229 = vdwg.mxu0
    %v230 = vld [vmem:[#allocation5 + $0xa0] sm:$0xff]
    %v231 = vld [vmem:[#allocation5 + $0xa8] sm:$0xff]
    %v232 = vld [vmem:[#allocation5 + $0xb0] sm:$0xff]
    %v233 = vld [vmem:[#allocation5 + $0xb8] sm:$0xff]
    %v234 = vld [vmem:[#allocation5 + $0xc0] sm:$0xff]
    %v235 = vld [vmem:[#allocation5 + $0xc8] sm:$0xff]
    %v236 = vld [vmem:[#allocation5 + $0xd0] sm:$0xff]
    %v237 = vld [vmem:[#allocation5 + $0xd8] sm:$0xff]
    %v238 = vld [vmem:[#allocation5 + $0xe0] sm:$0xff]
    %v239 = vld [vmem:[#allocation5 + $0xe8] sm:$0xff]
    %v240 = vld [vmem:[#allocation5 + $0xf0] sm:$0xff]
    %v241 = vld [vmem:[#allocation5 + $0xf8] sm:$0xff]
    %v242 = vld [vmem:[#allocation5 + $0x100] sm:$0xff]
    %v243 = vld [vmem:[#allocation5 + $0x108] sm:$0xff]
    %v244 = vld [vmem:[#allocation5 + $0x110] sm:$0xff]
    %v245 = vld [vmem:[#allocation5 + $0x118] sm:$0xff]
    %v246 = vlaneseq
    %v247 = vshrl.u32 %v246, 7
    %v248 = vsub.s32 2, %v247
    %v249 = vrot.slane %v42, %v248
    %250 = vmatprep.subr.mxu0 0.0
    %251 = vmatpush1.msra.mxu0 %v245
    %252 = vmatprep.subr.mxu0 0.0
    %253 = vmatpush1.msra.mxu0 %v244
    %254 = vmatprep.subr.mxu0 0.0
    %255 = vmatpush1.msra.mxu0 %v243
    %256 = vmatprep.subr.mxu0 0.0
    %257 = vmatpush1.msra.mxu0 %v242
    %258 = vmatprep.subr.mxu0 0.0
    %259 = vmatpush1.msra.mxu0 %v241
    %260 = vmatprep.subr.mxu0 0.0
    %261 = vmatpush1.msra.mxu0 %v240
    %262 = vmatprep.subr.mxu0 0.0
    %263 = vmatpush1.msra.mxu0 %v239
    %264 = vmatprep.subr.mxu0 0.0
    %265 = vmatpush1.msra.mxu0 %v238
    %266 = vmatprep.subr.mxu0 0.0
    %267 = vmatpush1.msra.mxu0 %v237
    %268 = vmatprep.subr.mxu0 0.0
    %269 = vmatpush1.msra.mxu0 %v236
    %270 = vmatprep.subr.mxu0 0.0
    %271 = vmatpush1.msra.mxu0 %v235
    %272 = vmatprep.subr.mxu0 0.0
    %273 = vmatpush1.msra.mxu0 %v234
    %274 = vmatprep.subr.mxu0 0.0
    %275 = vmatpush1.msra.mxu0 %v233
    %276 = vmatprep.subr.mxu0 0.0
    %277 = vmatpush1.msra.mxu0 %v232
    %278 = vmatprep.subr.mxu0 0.0
    %279 = vmatpush1.msra.mxu0 %v231
    %280 = vmatprep.subr.mxu0 0.0
    %281 = vmatpush1.msra.mxu0 %v230
    %282 = vmatprep.subr.mxu0 0.0
    %283 = vmatpush2.msra.mxu0 0.0
    %284 = vmatprep.subr.mxu0 0.0
    %285 = vmatpush2.msra.mxu0 0.0
    %286 = vmatprep.subr.mxu0 0.0
    %287 = vmatpush2.msra.mxu0 0.0
    %288 = vmatprep.subr.mxu0 0.0
    %289 = vmatpush2.msra.mxu0 0.0
    %290 = vmatprep.subr.mxu0 0.0
    %291 = vmatpush2.msra.mxu0 0.0
    %292 = vmatprep.subr.mxu0 0.0
    %293 = vmatpush2.msra.mxu0 0.0
    %294 = vmatprep.subr.mxu0 0.0
    %295 = vmatpush2.msra.mxu0 0.0
    %296 = vmatprep.subr.mxu0 0.0
    %297 = vmatpush2.msra.mxu0 0.0
    %298 = vmatprep.subr.mxu0 0.0
    %299 = vmatpush2.msra.mxu0 0.0
    %300 = vmatprep.subr.mxu0 0.0
    %301 = vmatpush2.msra.mxu0 0.0
    %302 = vmatprep.subr.mxu0 0.0
    %303 = vmatpush2.msra.mxu0 0.0
    %304 = vmatprep.subr.mxu0 0.0
    %305 = vmatpush2.msra.mxu0 0.0
    %306 = vmatprep.subr.mxu0 0.0
    %307 = vmatpush2.msra.mxu0 0.0
    %308 = vmatprep.subr.mxu0 0.0
    %309 = vmatpush2.msra.mxu0 0.0
    %310 = vmatprep.subr.mxu0 0.0
    %311 = vmatpush2.msra.mxu0 0.0
    %312 = vmatprep.subr.mxu0 0.0
    %313 = vmatpush2.msra.mxu0 0.0
    %314 = vmatprep.mubr.f32.mxu0 0.0
    %315 = vmatmul.mubr.f32.gmra.mxu0 %v222
    %v316 = vpop.f32.mrf.mxu0
    %v317 = vadd.f32 %v249, %v316
    %v318 = vpop.f32.mrf.mxu0
    %319 = vmatprep.mubr.f32.mxu0 0.0
    %320 = vmatmul.mubr.f32.gmra.mxu0 %v227
    %v321 = vpop.f32.mrf.mxu0
    %v322 = vadd.f32 %v249, %v321
    %v323 = vpop.f32.mrf.mxu0
    %324 = vdwg.mxu0
    %v325 = vmax.f32 %v317, 0.0
    %v326 = vmax.f32 %v322, 0.0
    %v327 = vld [vmem:[#allocation5 + $0x120] sm:$0xff]
    %v328 = vld [vmem:[#allocation5 + $0x128] sm:$0xff]
    %v329 = vld [vmem:[#allocation5 + $0x130] sm:$0xff]
    %v330 = vld [vmem:[#allocation5 + $0x138] sm:$0xff]
    %v331 = vld [vmem:[#allocation5 + $0x140] sm:$0xff]
    %v332 = vld [vmem:[#allocation5 + $0x148] sm:$0xff]
    %v333 = vld [vmem:[#allocation5 + $0x150] sm:$0xff]
    %v334 = vld [vmem:[#allocation5 + $0x158] sm:$0xff]
    %v335 = vld [vmem:[#allocation5 + $0x160] sm:$0xff]
    %v336 = vld [vmem:[#allocation5 + $0x168] sm:$0xff]
    %v337 = vld [vmem:[#allocation5 + $0x170] sm:$0xff]
    %v338 = vld [vmem:[#allocation5 + $0x178] sm:$0xff]
    %v339 = vld [vmem:[#allocation5 + $0x180] sm:$0xff]
    %v340 = vld [vmem:[#allocation5 + $0x188] sm:$0xff]
    %v341 = vld [vmem:[#allocation5 + $0x190] sm:$0xff]
    %v342 = vld [vmem:[#allocation5 + $0x198] sm:$0xff]
    %v343 = vlaneseq
    %v344 = vshrl.u32 %v343, 7
    %v345 = vsub.s32 3, %v344
    %v346 = vrot.slane %v42, %v345
    %347 = vmatprep.subr.mxu0 0.0
    %348 = vmatpush1.msra.mxu0 %v342
    %349 = vmatprep.subr.mxu0 0.0
    %350 = vmatpush1.msra.mxu0 %v341
    %351 = vmatprep.subr.mxu0 0.0
    %352 = vmatpush1.msra.mxu0 %v340
    %353 = vmatprep.subr.mxu0 0.0
    %354 = vmatpush1.msra.mxu0 %v339
    %355 = vmatprep.subr.mxu0 0.0
    %356 = vmatpush1.msra.mxu0 %v338
    %357 = vmatprep.subr.mxu0 0.0
    %358 = vmatpush1.msra.mxu0 %v337
    %359 = vmatprep.subr.mxu0 0.0
    %360 = vmatpush1.msra.mxu0 %v336
    %361 = vmatprep.subr.mxu0 0.0
    %362 = vmatpush1.msra.mxu0 %v335
    %363 = vmatprep.subr.mxu0 0.0
    %364 = vmatpush1.msra.mxu0 %v334
    %365 = vmatprep.subr.mxu0 0.0
    %366 = vmatpush1.msra.mxu0 %v333
    %367 = vmatprep.subr.mxu0 0.0
    %368 = vmatpush1.msra.mxu0 %v332
    %369 = vmatprep.subr.mxu0 0.0
    %370 = vmatpush1.msra.mxu0 %v331
    %371 = vmatprep.subr.mxu0 0.0
    %372 = vmatpush1.msra.mxu0 %v330
    %373 = vmatprep.subr.mxu0 0.0
    %374 = vmatpush1.msra.mxu0 %v329
    %375 = vmatprep.subr.mxu0 0.0
    %376 = vmatpush1.msra.mxu0 %v328
    %377 = vmatprep.subr.mxu0 0.0
    %378 = vmatpush1.msra.mxu0 %v327
    %379 = vmatprep.subr.mxu0 0.0
    %380 = vmatpush2.msra.mxu0 0.0
    %381 = vmatprep.subr.mxu0 0.0
    %382 = vmatpush2.msra.mxu0 0.0
    %383 = vmatprep.subr.mxu0 0.0
    %384 = vmatpush2.msra.mxu0 0.0
    %385 = vmatprep.subr.mxu0 0.0
    %386 = vmatpush2.msra.mxu0 0.0
    %387 = vmatprep.subr.mxu0 0.0
    %388 = vmatpush2.msra.mxu0 0.0
    %389 = vmatprep.subr.mxu0 0.0
    %390 = vmatpush2.msra.mxu0 0.0
    %391 = vmatprep.subr.mxu0 0.0
    %392 = vmatpush2.msra.mxu0 0.0
    %393 = vmatprep.subr.mxu0 0.0
    %394 = vmatpush2.msra.mxu0 0.0
    %395 = vmatprep.subr.mxu0 0.0
    %396 = vmatpush2.msra.mxu0 0.0
    %397 = vmatprep.subr.mxu0 0.0
    %398 = vmatpush2.msra.mxu0 0.0
    %399 = vmatprep.subr.mxu0 0.0
    %400 = vmatpush2.msra.mxu0 0.0
    %401 = vmatprep.subr.mxu0 0.0
    %402 = vmatpush2.msra.mxu0 0.0
    %403 = vmatprep.subr.mxu0 0.0
    %404 = vmatpush2.msra.mxu0 0.0
    %405 = vmatprep.subr.mxu0 0.0
    %406 = vmatpush2.msra.mxu0 0.0
    %407 = vmatprep.subr.mxu0 0.0
    %408 = vmatpush2.msra.mxu0 0.0
    %409 = vmatprep.subr.mxu0 0.0
    %410 = vmatpush2.msra.mxu0 0.0
    %411 = vmatprep.mubr.f32.mxu0 0.0
    %412 = vmatmul.mubr.f32.gmra.mxu0 %v325
    %v413 = vpop.f32.mrf.mxu0
    %v414 = vadd.f32 %v346, %v413
    %v415 = vpop.f32.mrf.mxu0
    %416 = vmatprep.mubr.f32.mxu0 0.0
    %417 = vmatmul.mubr.f32.gmra.mxu0 %v326
    %v418 = vpop.f32.mrf.mxu0
    %v419 = vadd.f32 %v346, %v418
    %v420 = vpop.f32.mrf.mxu0
    %421 = vdwg.mxu0
    %422 = vst [vmem:[#allocation7] sm:$0xff] %v414
    %423 = vst [vmem:[#allocation7 + $0x8] sm:$0xff] %v419
    // Predicated region
    $region18: #{tpu_custom_call.1} parent=1 // pred_check
      _
    $region19: #{tpu_custom_call.1} parent=1 // pred_check_branch
      %425 = sbr.rel (0) target = $region21
    $region20: #{tpu_custom_call.1} parent=1 // pred_region
      %s427 = ssub.s32 256, 256
      %428 = vsyncadd [#allocation4], %s427
      %s429 = sshll.u32 [#allocation7], 4
      %s430 = int_to_ptr.vmem [resolvable:$true] %s429
      %435 = dma.vmem_to_hbm [thread:$0]  %s430, 256, %s2, [#allocation4], 128, 128, 8
    $region21: #{tpu_custom_call.1} parent=1 // pred_fallthru
      _
    // Predicated region
    $region22: #{tpu_custom_call.1} parent=1 // pred_check
      _
    $region23: #{tpu_custom_call.1} parent=1 // pred_check_branch
      %437 = sbr.rel (0) target = $region25
    $region24: #{tpu_custom_call.1} parent=1 // pred_region
      %438 = dma.done [#allocation4], 256
    $region25: #{tpu_custom_call.1} parent=1 // pred_fallthru
      _
    %439 = vsyncpa [#allocation3], 1
    %440 = vsyncpa [#allocation6], 1
    %441 = vsyncpa [#allocation4], 1

</llo_original>
